<compile_context>
chip_gen: v7x
topology: tpu7x:2x2x1
jax: 0.10.0
libtpu: 0.0.40
codegen_flags: <defaults>
</compile_context>

<pallas_src>
import functools

import jax
import jax.numpy as jnp
from jax.experimental import pallas as pl
from jax.experimental.pallas import tpu as pltpu


def _round_up(v, m):
    return ((v + m - 1) // m) * m


def _actor_kernel(x_ref, w1_ref, b1_ref, w2_ref, b2_ref, out_ref, *, n_actions):
    # x_ref:  [TB, S]      w1_ref: [S, H]      b1_ref: [1, H]
    # w2_ref: [H, A_pad]   b2_ref: [1, A_pad]  out_ref: [TB, A]
    # Weights may be bf16 (pre-cast in the wrapper); biases are always f32.
    x = x_ref[...].astype(w1_ref.dtype)

    # Linear 1 (MXU) + bias.  K=32 under-fills the MXU but the kernel is
    # HBM-bound, so padding S would only add bytes (intentionally left as-is).
    h = jnp.dot(x, w1_ref[...], preferred_element_type=jnp.float32)
    h = h + b1_ref[...]                      # broadcast [1, H] over batch

    # Dropout (eval mode -> identity), then ReLU (VPU, f32).
    h = jnp.maximum(h, 0.0)

    # Linear 2 (MXU) + bias on the lane-dense padded action slab.  Padded
    # action columns carry a -1e30 f32 bias so they vanish under softmax.
    logits = jnp.dot(h.astype(w2_ref.dtype), w2_ref[...],
                     preferred_element_type=jnp.float32)
    logits = logits + b2_ref[...]

    # Numerically stable softmax along the last (lane) axis.
    m = jnp.max(logits, axis=-1, keepdims=True)
    e = jnp.exp(logits - m)
    denom = jnp.sum(e, axis=-1, keepdims=True)
    # approx=False -> exact normalization (rows sum to 1); the divide is not
    # the bottleneck of this HBM-bound kernel.
    probs = e * pl.reciprocal(denom, approx=False)

    # Store only the real action columns: narrow (lane-masked) store, but it
    # cuts HBM write traffic ~A_pad/A x vs. writing the padded slab.
    out_ref[...] = probs[:, :n_actions]


def actor_forward(x, w1, b1, w2, b2, *, block_b=1024, use_bf16_matmul=False):
    """Actor MLP + softmax as a single batch-tiled Pallas TPU kernel.

    x:  [B, state_dim] float32
    w1: [state_dim, 128], b1: [128]
    w2: [128, action_dim], b2: [action_dim]
    returns: [B, action_dim] action probabilities (rows sum to 1).
    """
    B, S = x.shape
    H = w1.shape[1]
    A = w2.shape[1]

    # Lane-dense compute slab: round the action axis up to a multiple of 128.
    A_pad = max(128, _round_up(A, 128))
    w2_p = jnp.zeros((H, A_pad), w2.dtype).at[:, :A].set(w2)
    # Padding-mask bias must stay f32 (wide range needed for -1e30).
    b2_p = jnp.full((1, A_pad), -1e30, jnp.float32).at[0, :A].set(
        b2.astype(jnp.float32))
    b1_2d = b1.astype(jnp.float32).reshape(1, H)

    if use_bf16_matmul:
        # One-time cast outside the kernel: halves resident weight bytes and
        # removes per-grid-step VPU casts.  (Roughly perf-neutral overall:
        # this kernel is HBM-bound, not MXU-bound.)
        w1 = w1.astype(jnp.bfloat16)
        w2_p = w2_p.astype(jnp.bfloat16)

    # Batch tile.  Tiny batches: one grid step (launch-latency bound anyway).
    # Large batches: guarantee >= 2 grid steps so the "parallel" batch axis
    # actually shards across both TensorCores on v7x.
    if B <= block_b:
        TB = B
    else:
        TB = min(block_b, _round_up(pl.cdiv(B, 2), 8))
        TB = max(8, (TB // 8) * 8)
    grid = (pl.cdiv(B, TB),)

    kernel = functools.partial(_actor_kernel, n_actions=A)

    itemsize_w = 2 if use_bf16_matmul else 4
    cost = pl.CostEstimate(
        flops=2 * B * (S * H + H * A_pad),
        transcendentals=B * A_pad,
        bytes_accessed=(4 * B * S                    # x in
                        + itemsize_w * (S * H + H * A_pad)  # weights in
                        + 4 * (H + A_pad)            # biases in
                        + 4 * B * A),                # probs out (real width)
    )

    return pl.pallas_call(
        kernel,
        out_shape=jax.ShapeDtypeStruct((B, A), jnp.float32),
        grid=grid,
        in_specs=[
            pl.BlockSpec((TB, S), lambda i: (i, 0)),      # x: tiled over batch
            pl.BlockSpec((S, H), lambda i: (0, 0)),       # w1: resident
            pl.BlockSpec((1, H), lambda i: (0, 0)),       # b1: resident
            pl.BlockSpec((H, A_pad), lambda i: (0, 0)),   # w2 (padded): resident
            pl.BlockSpec((1, A_pad), lambda i: (0, 0)),   # b2 (padded): resident
        ],
        out_specs=pl.BlockSpec((TB, A), lambda i: (i, 0)),
        compiler_params=pltpu.CompilerParams(
            dimension_semantics=("parallel",),            # megacore on v7x
        ),
        cost_estimate=cost,
    )(x, w1, b1_2d, w2_p, b2_p)


def _init_params(key, state_dim, hidden, action_dim):
    # Deterministic init mimicking nn.Linear's uniform(-1/sqrt(fan_in), ...).
    k1, k2, k3, k4 = jax.random.split(key, 4)
    bound1 = 1.0 / jnp.sqrt(state_dim)
    bound2 = 1.0 / jnp.sqrt(hidden)
    w1 = jax.random.uniform(k1, (state_dim, hidden), jnp.float32, -bound1, bound1)
    b1 = jax.random.uniform(k2, (hidden,), jnp.float32, -bound1, bound1)
    w2 = jax.random.uniform(k3, (hidden, action_dim), jnp.float32, -bound2, bound2)
    b2 = jax.random.uniform(k4, (action_dim,), jnp.float32, -bound2, bound2)
    return w1, b1, w2, b2


if __name__ == "__main__":
    key = jax.random.PRNGKey(0)
    k_param, k_x = jax.random.split(key)

    batch = 8
    state_dim = 32
    hidden = 128
    action_dim = 4

    w1, b1, w2, b2 = _init_params(k_param, state_dim, hidden, action_dim)
    x = jax.random.normal(k_x, (batch, state_dim), jnp.float32)

    probs = actor_forward(x, w1, b1, w2, b2)
    probs = jax.block_until_ready(probs)

    # Reference check in plain JAX (eval-mode dropout = identity).
    h_ref = jnp.maximum(x @ w1 + b1, 0.0)
    logits_ref = h_ref @ w2 + b2
    ref = jax.nn.softmax(logits_ref, axis=-1)

    assert probs.shape == (batch, action_dim)
    assert jnp.allclose(probs, ref, atol=1e-3, rtol=1e-3)
    assert jnp.allclose(jnp.sum(probs, axis=-1), 1.0, atol=1e-3)

    print("KERNEL_OK")
</pallas_src>

<mosaic_0001>
module attributes {stable_mosaic.version = 11 : i64} {
  func.func @_actor_kernel(%arg0: i32, %arg1: memref<8x32xf32, #tpu.memory_space<vmem>>, %arg2: memref<32x128xf32, #tpu.memory_space<vmem>>, %arg3: memref<1x128xf32, #tpu.memory_space<vmem>>, %arg4: memref<128x128xf32, #tpu.memory_space<vmem>>, %arg5: memref<1x128xf32, #tpu.memory_space<vmem>>, %arg6: memref<8x4xf32, #tpu.memory_space<vmem>>) attributes {dimension_semantics = [#tpu.dimension_semantics<parallel>], iteration_bounds = array<i64: 1>, scalar_prefetch = 0 : i64, scratch_operands = 0 : i64, tpu.core_type = #tpu.core_type<tc>, window_params = [{transform_indices = @transform_0, window_bounds = array<i64: 8, 32>}, {pipeline_mode = #tpu.pipeline_mode<synchronous>, transform_indices = @transform_1, window_bounds = array<i64: 32, 128>}, {pipeline_mode = #tpu.pipeline_mode<synchronous>, transform_indices = @transform_2, window_bounds = array<i64: 1, 128>}, {pipeline_mode = #tpu.pipeline_mode<synchronous>, transform_indices = @transform_3, window_bounds = array<i64: 128, 128>}, {pipeline_mode = #tpu.pipeline_mode<synchronous>, transform_indices = @transform_4, window_bounds = array<i64: 1, 128>}, {transform_indices = @transform_5, window_bounds = array<i64: 8, 4>}]} {
    %c0 = arith.constant 0 : index
    %c0_0 = arith.constant 0 : index
    %0 = vector.load %arg1[%c0, %c0_0] : memref<8x32xf32, #tpu.memory_space<vmem>>, vector<8x32xf32>
    %c0_1 = arith.constant 0 : index
    %c0_2 = arith.constant 0 : index
    %1 = vector.load %arg2[%c0_1, %c0_2] : memref<32x128xf32, #tpu.memory_space<vmem>>, vector<32x128xf32>
    %cst = arith.constant dense<0.000000e+00> : vector<8x128xf32>
    %2 = tpu.matmul %0, %1, %cst {dimension_numbers = #tpu.dot_dimension_numbers<[1], [0], [0], [1], [0, 0, 1, 1], [], []>} : vector<8x32xf32>, vector<32x128xf32>, vector<8x128xf32> -> vector<8x128xf32>
    %c0_3 = arith.constant 0 : index
    %c0_4 = arith.constant 0 : index
    %3 = vector.load %arg3[%c0_3, %c0_4] : memref<1x128xf32, #tpu.memory_space<vmem>>, vector<1x128xf32>
    %4 = vector.broadcast %3 : vector<1x128xf32> to vector<8x128xf32>
    %5 = arith.addf %2, %4 : vector<8x128xf32>
    %cst_5 = arith.constant 0.000000e+00 : f32
    %6 = vector.broadcast %cst_5 : f32 to vector<8x128xf32>
    %7 = arith.maximumf %5, %6 : vector<8x128xf32>
    %c0_6 = arith.constant 0 : index
    %c0_7 = arith.constant 0 : index
    %8 = vector.load %arg4[%c0_6, %c0_7] : memref<128x128xf32, #tpu.memory_space<vmem>>, vector<128x128xf32>
    %cst_8 = arith.constant dense<0.000000e+00> : vector<8x128xf32>
    %9 = tpu.matmul %7, %8, %cst_8 {dimension_numbers = #tpu.dot_dimension_numbers<[1], [0], [0], [1], [0, 0, 1, 1], [], []>} : vector<8x128xf32>, vector<128x128xf32>, vector<8x128xf32> -> vector<8x128xf32>
    %c0_9 = arith.constant 0 : index
    %c0_10 = arith.constant 0 : index
    %10 = vector.load %arg5[%c0_9, %c0_10] : memref<1x128xf32, #tpu.memory_space<vmem>>, vector<1x128xf32>
    %11 = vector.broadcast %10 : vector<1x128xf32> to vector<8x128xf32>
    %12 = arith.addf %9, %11 : vector<8x128xf32>
    %cst_11 = arith.constant dense<0xFF800000> : vector<8xf32>
    %13 = vector.multi_reduction <maximumf>, %12, %cst_11 [1] : vector<8x128xf32> to vector<8xf32>
    %14 = vector.shape_cast %13 : vector<8xf32> to vector<8x1xf32>
    %15 = vector.broadcast %14 : vector<8x1xf32> to vector<8x128xf32>
    %16 = arith.subf %12, %15 : vector<8x128xf32>
    %17 = math.exp %16 : vector<8x128xf32>
    %cst_12 = arith.constant dense<0.000000e+00> : vector<8xf32>
    %18 = vector.multi_reduction <add>, %17, %cst_12 [1] : vector<8x128xf32> to vector<8xf32>
    %19 = vector.shape_cast %18 : vector<8xf32> to vector<8x1xf32>
    %20 = tpu.reciprocal %19 : vector<8x1xf32> -> vector<8x1xf32>
    %21 = vector.broadcast %20 : vector<8x1xf32> to vector<8x128xf32>
    %22 = arith.mulf %17, %21 : vector<8x128xf32>
    %23 = vector.extract_strided_slice %22 {offsets = [0, 0], sizes = [8, 4], strides = [1, 1]} : vector<8x128xf32> to vector<8x4xf32>
    %c0_13 = arith.constant 0 : index
    %c0_14 = arith.constant 0 : index
    %24 = vector.load %arg6[%c0_13, %c0_14] : memref<8x4xf32, #tpu.memory_space<vmem>>, vector<8x4xf32>
    tpu.vector_store %arg6[%c0_13, %c0_14], %23 {strides = array<i32>} : memref<8x4xf32, #tpu.memory_space<vmem>>, vector<8x4xf32>,
    return
  }
  func.func @transform_0(%arg0: i32) -> (i32, i32) {
    %c0_i32 = arith.constant 0 : i32
    %c0_i32_0 = arith.constant 0 : i32
    return %arg0, %c0_i32 : i32, i32
  }
  func.func @transform_1(%arg0: i32) -> (i32, i32) {
    %c0_i32 = arith.constant 0 : i32
    %c0_i32_0 = arith.constant 0 : i32
    %c0_i32_1 = arith.constant 0 : i32
    return %c0_i32, %c0_i32_0 : i32, i32
  }
  func.func @transform_2(%arg0: i32) -> (i32, i32) {
    %c0_i32 = arith.constant 0 : i32
    %c0_i32_0 = arith.constant 0 : i32
    %c0_i32_1 = arith.constant 0 : i32
    return %c0_i32, %c0_i32_0 : i32, i32
  }
  func.func @transform_3(%arg0: i32) -> (i32, i32) {
    %c0_i32 = arith.constant 0 : i32
    %c0_i32_0 = arith.constant 0 : i32
    %c0_i32_1 = arith.constant 0 : i32
    return %c0_i32, %c0_i32_0 : i32, i32
  }
  func.func @transform_4(%arg0: i32) -> (i32, i32) {
    %c0_i32 = arith.constant 0 : i32
    %c0_i32_0 = arith.constant 0 : i32
    %c0_i32_1 = arith.constant 0 : i32
    return %c0_i32, %c0_i32_0 : i32, i32
  }
  func.func @transform_5(%arg0: i32) -> (i32, i32) {
    %c0_i32 = arith.constant 0 : i32
    %c0_i32_0 = arith.constant 0 : i32
    return %arg0, %c0_i32 : i32, i32
  }
}

</mosaic_0001>

<llo_original>
// kernel: tpu_custom_call.1
$region0: #{tpu_custom_call.1}
  #allocation0 [shape = 'u32[]', space=smem, size = 0x4, offset = 0x4, fixed_abs, tag = 'smem constant byte address 0x4 - core index']
  #allocation1 [shape = 'u32[144,128]{1,0:T(1,128)}', space=vmem, size = 0x12000, scoped, tag = 'internal scratch']
  %s0 = inlined_call_operand.hbm [shape: f32[8,32], index: 0, kind: input, shape index: {}]
  %s1 = inlined_call_operand.hbm [shape: f32[32,128], index: 1, kind: input, shape index: {}]
  %s2 = inlined_call_operand.vmem [shape: f32[1,128], index: 2, kind: input, shape index: {}]
  %s3 = inlined_call_operand.hbm [shape: f32[128,128], index: 3, kind: input, shape index: {}]
  %s4 = inlined_call_operand.vmem [shape: f32[1,128], index: 4, kind: input, shape index: {}]
  %s5 = inlined_call_operand.vmem [shape: f32[8,4], index: 5, kind: output, shape index: {}]
  %s6 = sld [smem:[#allocation0]]
  $region42: #{tpu_custom_call.1} parent=0
    _
  %s8 = ssub.s32 1, %s6
  %s9 = scalar_select 0, %s8, %s6
  $region1: #{tpu_custom_call.1} parent=0
    #allocation2 [shape = 'u8[4096]{0}', space=vmem, size = 0x1000, scoped, tag = 'input window, operand 0, single buffered']
    #allocation3 [shape = 's32[1]{0}', space=sflag, size = 0x4, scoped, tag = 'scoped memory for tpu_custom_call.1']
    #allocation4 [shape = 'u8[16384]{0}', space=vmem, size = 0x4000, scoped, tag = 'input window, operand 1, single buffered']
    #allocation5 [shape = 's32[1]{0}', space=sflag, size = 0x4, scoped, tag = 'scoped memory for tpu_custom_call.1']
    #allocation6 [shape = 'u8[65536]{0}', space=vmem, size = 0x10000, scoped, tag = 'input window, operand 3, single buffered']
    %10 = vsyncpa [#allocation3], 0
    %11 = vsyncpa [#allocation5], 0
    // Predicated region
    $region2: #{tpu_custom_call.1} parent=1 // pred_check
      _
    $region3: #{tpu_custom_call.1} parent=1 // pred_check_branch
      %13 = sbr.rel (0) target = $region5
    $region4: #{tpu_custom_call.1} parent=1 // pred_region
      %s15 = ssub.s32 128, 128
      %16 = vsyncadd [#allocation3], %s15
      %s18 = sshll.u32 [#allocation2], 4
      %s19 = int_to_ptr.vmem [resolvable:$true] %s18
      %21 = dma.hbm_to_vmem [thread:$0]  %s0, 128, %s19, [#allocation3]
    $region5: #{tpu_custom_call.1} parent=1 // pred_fallthru
      _
    // Predicated region
    $region6: #{tpu_custom_call.1} parent=1 // pred_check
      _
    $region7: #{tpu_custom_call.1} parent=1 // pred_check_branch
      %23 = sbr.rel (0) target = $region9
    $region8: #{tpu_custom_call.1} parent=1 // pred_region
      %s25 = ssub.s32 512, 512
      %26 = vsyncadd [#allocation5], %s25
      %s27 = sshll.u32 [#allocation4], 4
      %s28 = int_to_ptr.vmem [resolvable:$true] %s27
      %33 = dma.hbm_to_vmem [thread:$0]  %s1, 512, %s28, [#allocation5], 128, 128, 8
    $region9: #{tpu_custom_call.1} parent=1 // pred_fallthru
      _
    // Predicated region
    $region10: #{tpu_custom_call.1} parent=1 // pred_check
      _
    $region11: #{tpu_custom_call.1} parent=1 // pred_check_branch
      %35 = sbr.rel (0) target = $region13
    $region12: #{tpu_custom_call.1} parent=1 // pred_region
      _
    $region13: #{tpu_custom_call.1} parent=1 // pred_fallthru
      _
    // Predicated region
    $region14: #{tpu_custom_call.1} parent=1 // pred_check
      _
    $region15: #{tpu_custom_call.1} parent=1 // pred_check_branch
      %37 = sbr.rel (0) target = $region17
    $region16: #{tpu_custom_call.1} parent=1 // pred_region
      %s39 = ssub.s32 2048, 2048
      %40 = vsyncadd [#allocation5], %s39
      %s41 = sshll.u32 [#allocation6], 4
      %s42 = int_to_ptr.vmem [resolvable:$true] %s41
      %47 = dma.hbm_to_vmem [thread:$0]  %s3, 2048, %s42, [#allocation5], 128, 128, 8
    $region17: #{tpu_custom_call.1} parent=1 // pred_fallthru
      _
    // Predicated region
    $region18: #{tpu_custom_call.1} parent=1 // pred_check
      _
    $region19: #{tpu_custom_call.1} parent=1 // pred_check_branch
      %49 = sbr.rel (0) target = $region21
    $region20: #{tpu_custom_call.1} parent=1 // pred_region
      _
    $region21: #{tpu_custom_call.1} parent=1 // pred_fallthru
      _
    // Predicated region
    $region22: #{tpu_custom_call.1} parent=1 // pred_check
      _
    $region23: #{tpu_custom_call.1} parent=1 // pred_check_branch
      %51 = sbr.rel (0) target = $region25
    $region24: #{tpu_custom_call.1} parent=1 // pred_region
      %52 = dma.done [#allocation3], 128
    $region25: #{tpu_custom_call.1} parent=1 // pred_fallthru
      _
    // Predicated region
    $region26: #{tpu_custom_call.1} parent=1 // pred_check
      _
    $region27: #{tpu_custom_call.1} parent=1 // pred_check_branch
      %54 = sbr.rel (0) target = $region29
    $region28: #{tpu_custom_call.1} parent=1 // pred_region
      %55 = dma.done [#allocation5], 512
    $region29: #{tpu_custom_call.1} parent=1 // pred_fallthru
      _
    // Predicated region
    $region30: #{tpu_custom_call.1} parent=1 // pred_check
      _
    $region31: #{tpu_custom_call.1} parent=1 // pred_check_branch
      %57 = sbr.rel (0) target = $region33
    $region32: #{tpu_custom_call.1} parent=1 // pred_region
      %58 = dma.done [#allocation5], 2048
    $region33: #{tpu_custom_call.1} parent=1 // pred_fallthru
      _
    %v59 = vld [vmem:[#allocation2] sm:$0xff]
    %v60 = vld [vmem:[#allocation4] sm:$0xff]
    %v61 = vld [vmem:[#allocation4 + $0x8] sm:$0xff]
    %v62 = vld [vmem:[#allocation4 + $0x10] sm:$0xff]
    %v63 = vld [vmem:[#allocation4 + $0x18] sm:$0xff]
    %v64 = vld [vmem:[%s2] sm:$0x1]
    %v66 = vlaneseq
    %v67 = vshrl.u32 %v66, 7
    %v68 = vsub.s32 0, %v67
    %v69 = vrot.slane %v64, %v68
    %vm71 = vcmask 261120
    %v73 = vsel %vm71, %v59, 0
    %75 = vmatprep.subr.mxu0 0.0
    %76 = vmatpush1.msra.mxu0 %v60
    %77 = vmatprep.subr.mxu0 0.0
    %78 = vmatpush1.msra.mxu0 %v61
    %79 = vmatprep.subr.mxu0 0.0
    %80 = vmatpush1.msra.mxu0 %v62
    %81 = vmatprep.subr.mxu0 0.0
    %82 = vmatpush1.msra.mxu0 %v63
    %83 = vmatprep.subr.mxu0 0.0
    %84 = vmatpush1.msra.mxu0 0.0
    %85 = vmatprep.subr.mxu0 0.0
    %86 = vmatpush1.msra.mxu0 0.0
    %87 = vmatprep.subr.mxu0 0.0
    %88 = vmatpush1.msra.mxu0 0.0
    %89 = vmatprep.subr.mxu0 0.0
    %90 = vmatpush1.msra.mxu0 0.0
    %91 = vmatprep.subr.mxu0 0.0
    %92 = vmatpush1.msra.mxu0 0.0
    %93 = vmatprep.subr.mxu0 0.0
    %94 = vmatpush1.msra.mxu0 0.0
    %95 = vmatprep.subr.mxu0 0.0
    %96 = vmatpush1.msra.mxu0 0.0
    %97 = vmatprep.subr.mxu0 0.0
    %98 = vmatpush1.msra.mxu0 0.0
    %99 = vmatprep.subr.mxu0 0.0
    %100 = vmatpush1.msra.mxu0 0.0
    %101 = vmatprep.subr.mxu0 0.0
    %102 = vmatpush1.msra.mxu0 0.0
    %103 = vmatprep.subr.mxu0 0.0
    %104 = vmatpush1.msra.mxu0 0.0
    %105 = vmatprep.subr.mxu0 0.0
    %106 = vmatpush1.msra.mxu0 0.0
    %107 = vmatprep.subr.mxu0 0.0
    %108 = vmatpush1.msra.mxu0 0.0
    %109 = vmatprep.subr.mxu0 0.0
    %110 = vmatpush1.msra.mxu0 0.0
    %111 = vmatprep.subr.mxu0 0.0
    %112 = vmatpush1.msra.mxu0 0.0
    %113 = vmatprep.subr.mxu0 0.0
    %114 = vmatpush1.msra.mxu0 0.0
    %115 = vmatprep.subr.mxu0 0.0
    %116 = vmatpush1.msra.mxu0 0.0
    %117 = vmatprep.subr.mxu0 0.0
    %118 = vmatpush1.msra.mxu0 0.0
    %119 = vmatprep.subr.mxu0 0.0
    %120 = vmatpush1.msra.mxu0 0.0
    %121 = vmatprep.subr.mxu0 0.0
    %122 = vmatpush1.msra.mxu0 0.0
    %123 = vmatprep.subr.mxu0 0.0
    %124 = vmatpush1.msra.mxu0 0.0
    %125 = vmatprep.subr.mxu0 0.0
    %126 = vmatpush1.msra.mxu0 0.0
    %127 = vmatprep.subr.mxu0 0.0
    %128 = vmatpush1.msra.mxu0 0.0
    %129 = vmatprep.subr.mxu0 0.0
    %130 = vmatpush1.msra.mxu0 0.0
    %131 = vmatprep.subr.mxu0 0.0
    %132 = vmatpush1.msra.mxu0 0.0
    %133 = vmatprep.subr.mxu0 0.0
    %134 = vmatpush1.msra.mxu0 0.0
    %135 = vmatprep.subr.mxu0 0.0
    %136 = vmatpush1.msra.mxu0 0.0
    %137 = vmatprep.subr.mxu0 0.0
    %138 = vmatpush1.msra.mxu0 0.0
    %139 = vmatprep.mubr.f32.mxu0 0.0
    %140 = vmatmul.mubr.f32.gmra.mrb[0].mxu0 %v73
    %v141 = vpop.f32.mrb[0].mxu0
    %v142 = vadd.f32 %v69, %v141
    %v143 = vpop.f32.mrb[0].mxu0
    %144 = vdwg.mxu0
    %v145 = vmax.f32 %v142, 0.0
    %v146 = vld [vmem:[#allocation6] sm:$0xff]
    %v147 = vld [vmem:[#allocation6 + $0x8] sm:$0xff]
    %v148 = vld [vmem:[#allocation6 + $0x10] sm:$0xff]
    %v149 = vld [vmem:[#allocation6 + $0x18] sm:$0xff]
    %v150 = vld [vmem:[#allocation6 + $0x20] sm:$0xff]
    %v151 = vld [vmem:[#allocation6 + $0x28] sm:$0xff]
    %v152 = vld [vmem:[#allocation6 + $0x30] sm:$0xff]
    %v153 = vld [vmem:[#allocation6 + $0x38] sm:$0xff]
    %v154 = vld [vmem:[#allocation6 + $0x40] sm:$0xff]
    %v155 = vld [vmem:[#allocation6 + $0x48] sm:$0xff]
    %v156 = vld [vmem:[#allocation6 + $0x50] sm:$0xff]
    %v157 = vld [vmem:[#allocation6 + $0x58] sm:$0xff]
    %v158 = vld [vmem:[#allocation6 + $0x60] sm:$0xff]
    %v159 = vld [vmem:[#allocation6 + $0x68] sm:$0xff]
    %v160 = vld [vmem:[#allocation6 + $0x70] sm:$0xff]
    %v161 = vld [vmem:[#allocation6 + $0x78] sm:$0xff]
    %v162 = vld [vmem:[%s4] sm:$0x1]
    %v164 = vlaneseq
    %v165 = vshrl.u32 %v164, 7
    %v166 = vsub.s32 0, %v165
    %v167 = vrot.slane %v162, %v166
    %169 = vmatprep.subr.mxu0 0.0
    %170 = vmatpush1.msra.mxu0 %v146
    %171 = vmatprep.subr.mxu0 0.0
    %172 = vmatpush1.msra.mxu0 %v147
    %173 = vmatprep.subr.mxu0 0.0
    %174 = vmatpush1.msra.mxu0 %v148
    %175 = vmatprep.subr.mxu0 0.0
    %176 = vmatpush1.msra.mxu0 %v149
    %177 = vmatprep.subr.mxu0 0.0
    %178 = vmatpush1.msra.mxu0 %v150
    %179 = vmatprep.subr.mxu0 0.0
    %180 = vmatpush1.msra.mxu0 %v151
    %181 = vmatprep.subr.mxu0 0.0
    %182 = vmatpush1.msra.mxu0 %v152
    %183 = vmatprep.subr.mxu0 0.0
    %184 = vmatpush1.msra.mxu0 %v153
    %185 = vmatprep.subr.mxu0 0.0
    %186 = vmatpush1.msra.mxu0 %v154
    %187 = vmatprep.subr.mxu0 0.0
    %188 = vmatpush1.msra.mxu0 %v155
    %189 = vmatprep.subr.mxu0 0.0
    %190 = vmatpush1.msra.mxu0 %v156
    %191 = vmatprep.subr.mxu0 0.0
    %192 = vmatpush1.msra.mxu0 %v157
    %193 = vmatprep.subr.mxu0 0.0
    %194 = vmatpush1.msra.mxu0 %v158
    %195 = vmatprep.subr.mxu0 0.0
    %196 = vmatpush1.msra.mxu0 %v159
    %197 = vmatprep.subr.mxu0 0.0
    %198 = vmatpush1.msra.mxu0 %v160
    %199 = vmatprep.subr.mxu0 0.0
    %200 = vmatpush1.msra.mxu0 %v161
    %201 = vmatprep.subr.mxu0 0.0
    %202 = vmatpush1.msra.mxu0 0.0
    %203 = vmatprep.subr.mxu0 0.0
    %204 = vmatpush1.msra.mxu0 0.0
    %205 = vmatprep.subr.mxu0 0.0
    %206 = vmatpush1.msra.mxu0 0.0
    %207 = vmatprep.subr.mxu0 0.0
    %208 = vmatpush1.msra.mxu0 0.0
    %209 = vmatprep.subr.mxu0 0.0
    %210 = vmatpush1.msra.mxu0 0.0
    %211 = vmatprep.subr.mxu0 0.0
    %212 = vmatpush1.msra.mxu0 0.0
    %213 = vmatprep.subr.mxu0 0.0
    %214 = vmatpush1.msra.mxu0 0.0
    %215 = vmatprep.subr.mxu0 0.0
    %216 = vmatpush1.msra.mxu0 0.0
    %217 = vmatprep.subr.mxu0 0.0
    %218 = vmatpush1.msra.mxu0 0.0
    %219 = vmatprep.subr.mxu0 0.0
    %220 = vmatpush1.msra.mxu0 0.0
    %221 = vmatprep.subr.mxu0 0.0
    %222 = vmatpush1.msra.mxu0 0.0
    %223 = vmatprep.subr.mxu0 0.0
    %224 = vmatpush1.msra.mxu0 0.0
    %225 = vmatprep.subr.mxu0 0.0
    %226 = vmatpush1.msra.mxu0 0.0
    %227 = vmatprep.subr.mxu0 0.0
    %228 = vmatpush1.msra.mxu0 0.0
    %229 = vmatprep.subr.mxu0 0.0
    %230 = vmatpush1.msra.mxu0 0.0
    %231 = vmatprep.subr.mxu0 0.0
    %232 = vmatpush1.msra.mxu0 0.0
    %233 = vmatprep.mubr.f32.mxu0 0.0
    %234 = vmatmul.mubr.f32.gmra.mrb[0].mxu0 %v145
    %v235 = vpop.f32.mrb[0].mxu0
    %v236 = vadd.f32 %v167, %v235
    %v237 = vpop.f32.mrb[0].mxu0
    %238 = vdwg.mxu0
    %239 = vmax.xlane.f32.xlu0 %v236
    %v240 = vpop.xlane.xlu0 %239
    %v241 = vsub.f32 %v236, %v240
    %v242 = vmul.f32 %v241, 1.442695
    %v243 = vpow.pop %v242
    %244 = vadd.xlane.f32.xlu0 %v243
    %v245 = vpop.xlane.xlu0 %244
    %v246 = vrcp.pop %v245
    %v247 = vmul.f32 %v243, %v246
    %vm248 = vcmask 31744
    %249 = vst.msk [vmem:[%s5] sm:$0xff] %vm248, %v247
    // Predicated region
    $region34: #{tpu_custom_call.1} parent=1 // pred_check
      _
    $region35: #{tpu_custom_call.1} parent=1 // pred_check_branch
      %251 = sbr.rel (0) target = $region37
    $region36: #{tpu_custom_call.1} parent=1 // pred_region
      _
    $region37: #{tpu_custom_call.1} parent=1 // pred_fallthru
      _
    // Predicated region
    $region38: #{tpu_custom_call.1} parent=1 // pred_check
      _
    $region39: #{tpu_custom_call.1} parent=1 // pred_check_branch
      %253 = sbr.rel (0) target = $region41
    $region40: #{tpu_custom_call.1} parent=1 // pred_region
      _
    $region41: #{tpu_custom_call.1} parent=1 // pred_fallthru
      _
    %254 = vsyncpa [#allocation3], 1
    %255 = vsyncpa [#allocation5], 1

</llo_original>
